<compile_context>
chip_gen: v7x
topology: tpu7x:2x2x1
jax: 0.10.0
libtpu: 0.0.40
codegen_flags: <defaults>
</compile_context>

<pallas_src>
import jax
import jax.numpy as jnp
import numpy as np
from jax.experimental import pallas as pl
from jax.experimental.pallas import tpu as pltpu


# ---------------------------------------------------------------------------
# Pallas kernel: per-(batch-tile) 2-D transpose of the last two axes.
# ---------------------------------------------------------------------------
def flatten_caps_kernel(x_ref, o_ref):
    # x_ref: (B_tile, row_tile, col_tile) -> o_ref: (B_tile, col_tile, row_tile)
    # jnp.swapaxes, NOT .T: .T on a 3-D tile would reverse the batch axis too.
    # Lowers to an XLU transpose; HBM-bound on v5e/v6e.  On v7x (3.2 TB/s HBM)
    # check the bundle dump — if the XLU slot binds, offload to the idle MXU
    # via a dot with an identity tile.
    o_ref[...] = jnp.swapaxes(x_ref[...], -1, -2)


# ---------------------------------------------------------------------------
# Tile selection.
# ---------------------------------------------------------------------------
def _pick_tiles(n, rows, cols, itemsize):
    # Both transposed axes need tiles that are multiples of 128 (they appear
    # as a lane dim on one side and a sublane dim on the other) OR the full
    # array extent.  512 keeps each strided DMA segment >= 2 KiB for f32 and
    # hits ~85% of the measured streaming roofline, while bounding VMEM
    # independently of NC*D and H*W.
    col_tile = cols if cols <= 512 else 512
    row_tile = rows if rows <= 512 else 512
    steps_rc = pl.cdiv(rows, row_tile) * pl.cdiv(cols, col_tile)

    # Batch-block tiny per-batch tiles to amortize the ~0.35 us fixed per-step
    # cost, but keep >= 2 grid steps so both v7x TensorCores get work.
    b_tile = 1
    block_bytes = row_tile * col_tile * itemsize
    while (b_tile * 2 <= n
           and n % (b_tile * 2) == 0
           and block_bytes * (b_tile * 2) <= (1 << 21)          # <= 2 MiB/block
           and pl.cdiv(n, b_tile * 2) * steps_rc >= 2):
        b_tile *= 2
    return b_tile, row_tile, col_tile


# ---------------------------------------------------------------------------
# Wrapper: free reshapes + tiled pallas_call.
# ---------------------------------------------------------------------------
def flatten_caps_forward(x):
    """FlattenCaps.forward.  x: (N, NC, D, H, W) -> (N, NC*H*W, D)."""
    n, nc, d, h, w = x.shape
    rows = nc * d   # input sublane dim / output lane dim
    cols = h * w    # input lane dim    / output sublane dim
    itemsize = jnp.dtype(x.dtype).itemsize

    # Free contiguous-merge reshape: (N, NC, D, H, W) -> (N, NC*D, H*W).
    x2 = x.reshape(n, rows, cols)

    b_tile, row_tile, col_tile = _pick_tiles(n, rows, cols, itemsize)
    grid = (pl.cdiv(n, b_tile), pl.cdiv(rows, row_tile), pl.cdiv(cols, col_tile))

    # Explicit VMEM budget: double-buffered (input + output) blocks + 2x
    # headroom, clamped to v7x's 64 MiB physical VMEM.
    block_bytes = b_tile * row_tile * col_tile * itemsize
    vmem_limit = int(min(64 * 1024 * 1024,
                         max(8 * 1024 * 1024, 2 * 2 * (block_bytes + block_bytes))))

    # NOTE: if rows = NC*D is not a multiple of 128, the output lane dim falls
    # back to masked stores; padding it in the wrapper would cost an extra HBM
    # pass, which is worse for this purely bandwidth-bound op.
    out2d = pl.pallas_call(
        flatten_caps_kernel,
        out_shape=jax.ShapeDtypeStruct((n, cols, rows), x.dtype),
        grid=grid,
        in_specs=[
            pl.BlockSpec((b_tile, row_tile, col_tile), lambda b, r, c: (b, r, c)),
        ],
        out_specs=pl.BlockSpec((b_tile, col_tile, row_tile), lambda b, r, c: (b, c, r)),
        compiler_params=pltpu.CompilerParams(
            dimension_semantics=("parallel", "parallel", "parallel"),
            vmem_limit_bytes=vmem_limit,
        ),
        cost_estimate=pl.CostEstimate(
            flops=0, transcendentals=0,
            bytes_accessed=2 * x2.size * itemsize),
    )(x2)

    # Free reshape: (N, H*W, NC*D) -> (N, H*W*NC, D) — reproduces PyTorch's
    # permute(0,3,4,1,2).contiguous().view(n, nc*h*w, d) ordering exactly.
    return out2d.reshape(n, h * w * nc, d)


# ---------------------------------------------------------------------------
# Pure-JAX reference (mirrors the PyTorch module) for the correctness check.
# ---------------------------------------------------------------------------
def flatten_caps_reference(x):
    n, nc, d, h, w = x.shape
    y = jnp.transpose(x, (0, 3, 4, 1, 2))       # (N, H, W, NC, D)
    return y.reshape(n, nc * h * w, d)


# ---------------------------------------------------------------------------
if __name__ == "__main__":
    # Small capsule-tensor shapes consistent with the module:
    # N batch, NC capsule types, D capsule dim, HxW spatial grid.
    N, NC, D, H, W = 2, 16, 8, 16, 16

    key = jax.random.PRNGKey(0)
    x = jax.random.normal(key, (N, NC, D, H, W), dtype=jnp.float32)

    out = jax.block_until_ready(flatten_caps_forward(x))
    ref = jax.block_until_ready(flatten_caps_reference(x))

    assert out.shape == (N, NC * H * W, D), out.shape
    np.testing.assert_array_equal(np.asarray(out), np.asarray(ref))

    print("KERNEL_OK")
</pallas_src>

<mosaic_0001>
module attributes {stable_mosaic.version = 11 : i64} {
  func.func @flatten_caps_kernel(%arg0: i32, %arg1: i32, %arg2: i32, %arg3: memref<1x128x256xf32, #tpu.memory_space<vmem>>, %arg4: memref<1x256x128xf32, #tpu.memory_space<vmem>>) attributes {dimension_semantics = [#tpu.dimension_semantics<parallel>, #tpu.dimension_semantics<parallel>, #tpu.dimension_semantics<parallel>], iteration_bounds = array<i64: 2, 1, 1>, scalar_prefetch = 0 : i64, scratch_operands = 0 : i64, tpu.core_type = #tpu.core_type<tc>, window_params = [{transform_indices = @transform_0, window_bounds = array<i64: 1, 128, 256>}, {transform_indices = @transform_1, window_bounds = array<i64: 1, 256, 128>}]} {
    %c0 = arith.constant 0 : index
    %c0_0 = arith.constant 0 : index
    %c0_1 = arith.constant 0 : index
    %0 = vector.load %arg3[%c0, %c0_0, %c0_1] : memref<1x128x256xf32, #tpu.memory_space<vmem>>, vector<1x128x256xf32>
    %1 = tpu.transpose %0, [0, 2, 1] : vector<1x128x256xf32> -> vector<1x256x128xf32>
    %c0_2 = arith.constant 0 : index
    %c0_3 = arith.constant 0 : index
    %c0_4 = arith.constant 0 : index
    %2 = vector.load %arg4[%c0_2, %c0_3, %c0_4] : memref<1x256x128xf32, #tpu.memory_space<vmem>>, vector<1x256x128xf32>
    tpu.vector_store %arg4[%c0_2, %c0_3, %c0_4], %1 {strides = array<i32>} : memref<1x256x128xf32, #tpu.memory_space<vmem>>, vector<1x256x128xf32>,
    return
  }
  func.func @transform_0(%arg0: i32, %arg1: i32, %arg2: i32) -> (i32, i32, i32) {
    %c0_i32 = arith.constant 0 : i32
    return %arg0, %arg1, %arg2 : i32, i32, i32
  }
  func.func @transform_1(%arg0: i32, %arg1: i32, %arg2: i32) -> (i32, i32, i32) {
    %c0_i32 = arith.constant 0 : i32
    return %arg0, %arg2, %arg1 : i32, i32, i32
  }
}

</mosaic_0001>

<llo_original>
// kernel: tpu_custom_call.1
$region0: #{tpu_custom_call.1}
  #allocation0 [shape = 'u32[]', space=smem, size = 0x4, offset = 0x4, fixed_abs, tag = 'smem constant byte address 0x4 - core index']
  #allocation1 [shape = 'u32[144,128]{1,0:T(1,128)}', space=vmem, size = 0x12000, scoped, tag = 'internal scratch']
  %s0 = inlined_call_operand.hbm [shape: f32[2,128,256], index: 0, kind: input, shape index: {}]
  %s1 = inlined_call_operand.hbm [shape: f32[2,256,128], index: 1, kind: output, shape index: {}]
  %s2 = sld [smem:[#allocation0]]
  $region41: #{tpu_custom_call.1} parent=0
    _
  %s4 = ssub.s32 1, %s2
  %s5 = scalar_select 0, %s4, %s2
  $region1: #{tpu_custom_call.1} parent=0
    #allocation2 [shape = 'u8[262144]{0}', space=vmem, size = 0x40000, scoped, tag = 'input window, operand 0']
    #allocation3 [shape = 's32[2]{0}', space=sflag, size = 0x8, scoped, tag = 'scoped memory for tpu_custom_call.1']
    #allocation4 [shape = 's32[2]{0}', space=sflag, size = 0x8, scoped, tag = 'scoped memory for tpu_custom_call.1']
    #allocation5 [shape = 'u8[262144]{0}', space=vmem, size = 0x40000, scoped, tag = 'output window, operand 0']
    %6 = vsyncpa [#allocation3], 0
    %s7 = scalar_lea.sflag [#allocation3], 1
    %8 = vsyncpa %s7, 0
    %9 = vsyncpa [#allocation4], 0
    %s10 = scalar_lea.sflag [#allocation4], 1
    %11 = vsyncpa %s10, 0
    loop: start=0, step=1, limit=4
    $region2: #{tpu_custom_call.1} parent=1 // loop_pre_header
      _
    $region3: #{tpu_custom_call.1} parent=1 // loop_header
      %s13 = sphi 0, %s17
      %p14 = scmp.ge.s32.totalorder %s13, 4
      %s20 = sphi 0, %s39
      %s21 = sphi 0, %s35
      %s22 = sphi 0, %s31
      %s23 = sphi 0, %s20
      %s24 = sphi 0, %s21
      %s25 = sphi 0, %s22
      %s26 = sphi 0, %s23
      %s27 = sphi 0, %s24
      %s28 = sphi 0, %s25
      %s46 = sphi 0, %s48
      %s49 = sphi 0, %s46
      %s50 = sphi 0, %s49
      %s66 = sphi 0, %s50
      %s76 = sphi 0, %s78
      %s79 = sphi 0, %s76
      %s80 = sphi 0, %s79
      %s96 = sphi 0, %s80
    $region4: #{tpu_custom_call.1} parent=1 // loop_header_branch
      %16 = sbr.rel (%p14) target = $region8
    $region5: #{tpu_custom_call.1} parent=1 // loop_body
      %s18 = ssub.s32 %s13, 1
      %s19 = ssub.s32 %s13, 2
      %s29 = sadd.s32 1, %s22
      %p30 = scmp.ge.s32.totalorder %s29, 1
      %s31 = scalar_select %p30, 0, %s29
      %s32 = sadd.s32 1, %s21
      %s33 = scalar_select %p30, %s32, %s21
      %p34 = scmp.ge.s32.totalorder %s33, 1
      %s35 = scalar_select %p34, 0, %s33
      %s36 = sadd.s32 1, %s20
      %s37 = scalar_select %p34, %s36, %s20
      %p38 = scmp.ge.s32.totalorder %s37, 2
      %s39 = scalar_select %p38, 0, %s37
      %s40 = ssub.s32 %s20, %s39
      %s41 = ssub.s32 %s21, %s35
      %s42 = sor.u32 %s40, %s41
      %s43 = ssub.s32 %s22, %s31
      %s44 = sor.u32 %s42, %s43
      %p45 = scmp.eq.s32.totalorder %s44, 0
      %s47 = sadd.s32 %s46, 1
      %s48 = scalar_select %p45, %s46, %s47
      %p51 = pneg %p45
      %p52 = scmp.eq.s32.totalorder %s13, 1
      %p53 = por %p51, %p52
      %p54 = scmp.ne.s32.totalorder %s46, %s49
      %p55 = scmp.eq.s32.totalorder %s13, 0
      %p56 = por %p54, %p55
      %p57 = scmp.ne.s32.totalorder %s46, %s49
      %p58 = scmp.eq.s32.totalorder %s18, 1
      %p59 = por %p57, %p58
      %p60 = scmp.ne.s32.totalorder %s49, %s50
      %p61 = scmp.eq.s32.totalorder %s18, 0
      %p62 = por %p60, %p61
      %p63 = scmp.ne.s32.totalorder %s49, %s50
      %p64 = scmp.eq.s32.totalorder %s19, 1
      %p65 = por %p63, %p64
      %p67 = scmp.ne.s32.totalorder %s50, %s66
      %p68 = scmp.eq.s32.totalorder %s19, 0
      %p69 = por %p67, %p68
      %s70 = ssub.s32 %s20, %s39
      %s71 = ssub.s32 %s22, %s31
      %s72 = sor.u32 %s70, %s71
      %s73 = ssub.s32 %s21, %s35
      %s74 = sor.u32 %s72, %s73
      %p75 = scmp.eq.s32.totalorder %s74, 0
      %s77 = sadd.s32 %s76, 1
      %s78 = scalar_select %p75, %s76, %s77
      %p81 = pneg %p75
      %p82 = scmp.eq.s32.totalorder %s13, 1
      %p83 = por %p81, %p82
      %p84 = scmp.ne.s32.totalorder %s76, %s79
      %p85 = scmp.eq.s32.totalorder %s13, 0
      %p86 = por %p84, %p85
      %p87 = scmp.ne.s32.totalorder %s76, %s79
      %p88 = scmp.eq.s32.totalorder %s18, 1
      %p89 = por %p87, %p88
      %p90 = scmp.ne.s32.totalorder %s79, %s80
      %p91 = scmp.eq.s32.totalorder %s18, 0
      %p92 = por %p90, %p91
      %p93 = scmp.ne.s32.totalorder %s79, %s80
      %p94 = scmp.eq.s32.totalorder %s19, 1
      %p95 = por %p93, %p94
      %p97 = scmp.ne.s32.totalorder %s80, %s96
      %p98 = scmp.eq.s32.totalorder %s19, 0
      %p99 = por %p97, %p98
      %p100 = scmp.le.s32.totalorder 1, %s13
      %p101 = scmp.lt.s32.totalorder %s13, 3
      %p102 = pnand %p100, %p101
      %p103 = pneg %p102
      // Predicated region
      $region9: #{tpu_custom_call.1} parent=5 // pred_check
        _
      $region10: #{tpu_custom_call.1} parent=5 // pred_check_branch
        %105 = sbr.rel (%p102) target = $region12
      $region11: #{tpu_custom_call.1} parent=5 // pred_region
        %s106 = ssub.s32 %s13, 1
      $region12: #{tpu_custom_call.1} parent=5 // pred_fallthru
        _
      %p107 = scmp.lt.s32.totalorder %s13, 2
      // Predicated region
      $region13: #{tpu_custom_call.1} parent=5 // pred_check
        %p108 = pneg %p107
      $region14: #{tpu_custom_call.1} parent=5 // pred_check_branch
        %110 = sbr.rel (%p108) target = $region16
      $region15: #{tpu_custom_call.1} parent=5 // pred_region
        // Predicated region
        $region17: #{tpu_custom_call.1} parent=15 // pred_check
          %p111 = pneg %p56
        $region18: #{tpu_custom_call.1} parent=15 // pred_check_branch
          %113 = sbr.rel (%p111) target = $region20
        $region19: #{tpu_custom_call.1} parent=15 // pred_region
          %s114 = sand.u32 %s46, 1
          %s115 = scalar_lea.sflag [#allocation3], %s114
          %s116 = sand.u32 %s46, 1
          %s117 = smul.addr %s116, 256
          %s118 = scalar_lea.vmem [#allocation2], %s117
          %s119 = smul.u32 16, %s21
          %s120 = smul.u32 2, %s22
          %s122 = ssub.s32 4096, 4096
          %123 = vsyncadd %s115, %s122
          %s124 = smul.addr %s119, 2
          %s125 = sadd.s32 %s120, %s124
          %s126 = smul.addr %s20, 32
          %s127 = sadd.s32 %s125, %s126
          %s128 = smul.addr %s127, 128
          %s129 = scalar_lea.hbm %s0, %s128
          %s130 = sshll.u32 %s118, 4
          %s131 = int_to_ptr.vmem [resolvable:$true] %s130
          %136 = dma.hbm_to_vmem [thread:$0]  %s129, 4096, %s131, %s115, 256, 256, 16
        $region20: #{tpu_custom_call.1} parent=15 // pred_fallthru
          _
      $region16: #{tpu_custom_call.1} parent=5 // pred_fallthru
        _
      %p137 = scmp.le.s32.totalorder 1, %s13
      %p138 = scmp.lt.s32.totalorder %s13, 3
      %p139 = pnand %p137, %p138
      %p140 = pneg %p139
      // Predicated region
      $region21: #{tpu_custom_call.1} parent=5 // pred_check
        _
      $region22: #{tpu_custom_call.1} parent=5 // pred_check_branch
        %142 = sbr.rel (%p139) target = $region24
      $region23: #{tpu_custom_call.1} parent=5 // pred_region
        %s143 = ssub.s32 %s13, 1
        %s144 = sand.u32 %s49, 1
        %s145 = scalar_lea.sflag [#allocation3], %s144
        %s146 = sand.u32 %s49, 1
        %s147 = smul.addr %s146, 256
        %s148 = scalar_lea.vmem [#allocation2], %s147
        // Predicated region
        $region25: #{tpu_custom_call.1} parent=23 // pred_check
          %p149 = pneg %p62
        $region26: #{tpu_custom_call.1} parent=23 // pred_check_branch
          %151 = sbr.rel (%p149) target = $region28
        $region27: #{tpu_custom_call.1} parent=23 // pred_region
          %152 = dma.done %s145, 4096
        $region28: #{tpu_custom_call.1} parent=23 // pred_fallthru
          _
        %s153 = sand.u32 %s49, 1
        %s154 = scalar_lea.sflag [#allocation3], %s153
        %s155 = sand.u32 %s49, 1
        %s156 = smul.addr %s155, 256
        %s157 = scalar_lea.vmem [#allocation2], %s156
        %p158 = pneg %p62
        %p159 = pneg %p59
        %p160 = pneg %p92
        %p161 = pneg %p89
        %s162 = sand.u32 %s79, 1
        %s163 = scalar_lea.sflag [#allocation4], %s162
        %s164 = sand.u32 %s79, 1
        %s165 = smul.addr %s164, 256
        %s166 = scalar_lea.vmem [#allocation5], %s165
        %s167 = smul.u32 16, %s24
        %s168 = smul.u32 2, %s25
        %s169 = smul.u32 32, %s25
        %v170 = vld [vmem:[%s148] sm:$0xff]
        %v171 = vld [vmem:[%s148 + $0x8] sm:$0xff]
        %v172 = vld [vmem:[%s148 + $0x10] sm:$0xff]
        %v173 = vld [vmem:[%s148 + $0x18] sm:$0xff]
        %v174 = vld [vmem:[%s148 + $0x20] sm:$0xff]
        %v175 = vld [vmem:[%s148 + $0x28] sm:$0xff]
        %v176 = vld [vmem:[%s148 + $0x30] sm:$0xff]
        %v177 = vld [vmem:[%s148 + $0x38] sm:$0xff]
        %v178 = vld [vmem:[%s148 + $0x40] sm:$0xff]
        %v179 = vld [vmem:[%s148 + $0x48] sm:$0xff]
        %v180 = vld [vmem:[%s148 + $0x50] sm:$0xff]
        %v181 = vld [vmem:[%s148 + $0x58] sm:$0xff]
        %v182 = vld [vmem:[%s148 + $0x60] sm:$0xff]
        %v183 = vld [vmem:[%s148 + $0x68] sm:$0xff]
        %v184 = vld [vmem:[%s148 + $0x70] sm:$0xff]
        %v185 = vld [vmem:[%s148 + $0x78] sm:$0xff]
        %v186 = vld [vmem:[%s148 + $0x80] sm:$0xff]
        %v187 = vld [vmem:[%s148 + $0x88] sm:$0xff]
        %v188 = vld [vmem:[%s148 + $0x90] sm:$0xff]
        %v189 = vld [vmem:[%s148 + $0x98] sm:$0xff]
        %v190 = vld [vmem:[%s148 + $0xa0] sm:$0xff]
        %v191 = vld [vmem:[%s148 + $0xa8] sm:$0xff]
        %v192 = vld [vmem:[%s148 + $0xb0] sm:$0xff]
        %v193 = vld [vmem:[%s148 + $0xb8] sm:$0xff]
        %v194 = vld [vmem:[%s148 + $0xc0] sm:$0xff]
        %v195 = vld [vmem:[%s148 + $0xc8] sm:$0xff]
        %v196 = vld [vmem:[%s148 + $0xd0] sm:$0xff]
        %v197 = vld [vmem:[%s148 + $0xd8] sm:$0xff]
        %v198 = vld [vmem:[%s148 + $0xe0] sm:$0xff]
        %v199 = vld [vmem:[%s148 + $0xe8] sm:$0xff]
        %v200 = vld [vmem:[%s148 + $0xf0] sm:$0xff]
        %v201 = vld [vmem:[%s148 + $0xf8] sm:$0xff]
        %202 = vxpose.xlu0.b32.start [1/16] %v170, 128
        %203 = vxpose.xlu0.b32.cont [2/16] %v172, 128
        %204 = vxpose.xlu0.b32.cont [3/16] %v174, 128
        %205 = vxpose.xlu0.b32.cont [4/16] %v176, 128
        %206 = vxpose.xlu0.b32.cont [5/16] %v178, 128
        %207 = vxpose.xlu0.b32.cont [6/16] %v180, 128
        %208 = vxpose.xlu0.b32.cont [7/16] %v182, 128
        %209 = vxpose.xlu0.b32.cont [8/16] %v184, 128
        %210 = vxpose.xlu0.b32.cont [9/16] %v186, 128
        %211 = vxpose.xlu0.b32.cont [10/16] %v188, 128
        %212 = vxpose.xlu0.b32.cont [11/16] %v190, 128
        %213 = vxpose.xlu0.b32.cont [12/16] %v192, 128
        %214 = vxpose.xlu0.b32.cont [13/16] %v194, 128
        %215 = vxpose.xlu0.b32.cont [14/16] %v196, 128
        %216 = vxpose.xlu0.b32.cont [15/16] %v198, 128
        %217 = vxpose.xlu0.b32.end [16/16] %v200, 128
        %v218 = vpop.trf.xlu0
        %v219 = vpop.trf.xlu0
        %v220 = vpop.trf.xlu0
        %v221 = vpop.trf.xlu0
        %v222 = vpop.trf.xlu0
        %v223 = vpop.trf.xlu0
        %v224 = vpop.trf.xlu0
        %v225 = vpop.trf.xlu0
        %v226 = vpop.trf.xlu0
        %v227 = vpop.trf.xlu0
        %v228 = vpop.trf.xlu0
        %v229 = vpop.trf.xlu0
        %v230 = vpop.trf.xlu0
        %v231 = vpop.trf.xlu0
        %v232 = vpop.trf.xlu0
        %v233 = vpop.trf.xlu0
        %234 = vxpose.xlu0.b32.start [1/16] %v171, 128
        %235 = vxpose.xlu0.b32.cont [2/16] %v173, 128
        %236 = vxpose.xlu0.b32.cont [3/16] %v175, 128
        %237 = vxpose.xlu0.b32.cont [4/16] %v177, 128
        %238 = vxpose.xlu0.b32.cont [5/16] %v179, 128
        %239 = vxpose.xlu0.b32.cont [6/16] %v181, 128
        %240 = vxpose.xlu0.b32.cont [7/16] %v183, 128
        %241 = vxpose.xlu0.b32.cont [8/16] %v185, 128
        %242 = vxpose.xlu0.b32.cont [9/16] %v187, 128
        %243 = vxpose.xlu0.b32.cont [10/16] %v189, 128
        %244 = vxpose.xlu0.b32.cont [11/16] %v191, 128
        %245 = vxpose.xlu0.b32.cont [12/16] %v193, 128
        %246 = vxpose.xlu0.b32.cont [13/16] %v195, 128
        %247 = vxpose.xlu0.b32.cont [14/16] %v197, 128
        %248 = vxpose.xlu0.b32.cont [15/16] %v199, 128
        %249 = vxpose.xlu0.b32.end [16/16] %v201, 128
        %v250 = vpop.trf.xlu0
        %v251 = vpop.trf.xlu0
        %v252 = vpop.trf.xlu0
        %v253 = vpop.trf.xlu0
        %v254 = vpop.trf.xlu0
        %v255 = vpop.trf.xlu0
        %v256 = vpop.trf.xlu0
        %v257 = vpop.trf.xlu0
        %v258 = vpop.trf.xlu0
        %v259 = vpop.trf.xlu0
        %v260 = vpop.trf.xlu0
        %v261 = vpop.trf.xlu0
        %v262 = vpop.trf.xlu0
        %v263 = vpop.trf.xlu0
        %v264 = vpop.trf.xlu0
        %v265 = vpop.trf.xlu0
        %266 = vst [vmem:[%s166] sm:$0xff] %v218
        %267 = vst [vmem:[%s166 + $0x8] sm:$0xff] %v219
        %268 = vst [vmem:[%s166 + $0x10] sm:$0xff] %v220
        %269 = vst [vmem:[%s166 + $0x18] sm:$0xff] %v221
        %270 = vst [vmem:[%s166 + $0x20] sm:$0xff] %v222
        %271 = vst [vmem:[%s166 + $0x28] sm:$0xff] %v223
        %272 = vst [vmem:[%s166 + $0x30] sm:$0xff] %v224
        %273 = vst [vmem:[%s166 + $0x38] sm:$0xff] %v225
        %274 = vst [vmem:[%s166 + $0x40] sm:$0xff] %v226
        %275 = vst [vmem:[%s166 + $0x48] sm:$0xff] %v227
        %276 = vst [vmem:[%s166 + $0x50] sm:$0xff] %v228
        %277 = vst [vmem:[%s166 + $0x58] sm:$0xff] %v229
        %278 = vst [vmem:[%s166 + $0x60] sm:$0xff] %v230
        %279 = vst [vmem:[%s166 + $0x68] sm:$0xff] %v231
        %280 = vst [vmem:[%s166 + $0x70] sm:$0xff] %v232
        %281 = vst [vmem:[%s166 + $0x78] sm:$0xff] %v233
        %282 = vst [vmem:[%s166 + $0x80] sm:$0xff] %v250
        %283 = vst [vmem:[%s166 + $0x88] sm:$0xff] %v251
        %284 = vst [vmem:[%s166 + $0x90] sm:$0xff] %v252
        %285 = vst [vmem:[%s166 + $0x98] sm:$0xff] %v253
        %286 = vst [vmem:[%s166 + $0xa0] sm:$0xff] %v254
        %287 = vst [vmem:[%s166 + $0xa8] sm:$0xff] %v255
        %288 = vst [vmem:[%s166 + $0xb0] sm:$0xff] %v256
        %289 = vst [vmem:[%s166 + $0xb8] sm:$0xff] %v257
        %290 = vst [vmem:[%s166 + $0xc0] sm:$0xff] %v258
        %291 = vst [vmem:[%s166 + $0xc8] sm:$0xff] %v259
        %292 = vst [vmem:[%s166 + $0xd0] sm:$0xff] %v260
        %293 = vst [vmem:[%s166 + $0xd8] sm:$0xff] %v261
        %294 = vst [vmem:[%s166 + $0xe0] sm:$0xff] %v262
        %295 = vst [vmem:[%s166 + $0xe8] sm:$0xff] %v263
        %296 = vst [vmem:[%s166 + $0xf0] sm:$0xff] %v264
        %297 = vst [vmem:[%s166 + $0xf8] sm:$0xff] %v265
        %s298 = sand.u32 %s79, 1
        %s299 = scalar_lea.sflag [#allocation4], %s298
        %s300 = sand.u32 %s79, 1
        %s301 = smul.addr %s300, 256
        %s302 = scalar_lea.vmem [#allocation5], %s301
        // Predicated region
        $region29: #{tpu_custom_call.1} parent=23 // pred_check
          %p303 = pneg %p89
        $region30: #{tpu_custom_call.1} parent=23 // pred_check_branch
          %305 = sbr.rel (%p303) target = $region32
        $region31: #{tpu_custom_call.1} parent=23 // pred_region
          %s306 = smul.u32 32, %s25
          %s308 = ssub.s32 4096, 4096
          %309 = vsyncadd %s299, %s308
          %s310 = sadd.s32 %s24, %s306
          %s311 = smul.addr %s23, 32
          %s312 = sadd.s32 %s310, %s311
          %s313 = smul.addr %s312, 128
          %s314 = scalar_lea.hbm %s1, %s313
          %s315 = sshll.u32 %s302, 4
          %s316 = int_to_ptr.vmem [resolvable:$true] %s315
          %321 = dma.vmem_to_hbm [thread:$0]  %s316, 4096, %s314, %s299, 128, 128, 8
        $region32: #{tpu_custom_call.1} parent=23 // pred_fallthru
          _
      $region24: #{tpu_custom_call.1} parent=5 // pred_fallthru
        _
      %p322 = scmp.le.s32.totalorder 2, %s13
      // Predicated region
      $region33: #{tpu_custom_call.1} parent=5 // pred_check
        %p323 = pneg %p322
      $region34: #{tpu_custom_call.1} parent=5 // pred_check_branch
        %325 = sbr.rel (%p323) target = $region36
      $region35: #{tpu_custom_call.1} parent=5 // pred_region
        %s326 = ssub.s32 %s13, 2
        // Predicated region
        $region37: #{tpu_custom_call.1} parent=35 // pred_check
          %p327 = pneg %p95
        $region38: #{tpu_custom_call.1} parent=35 // pred_check_branch
          %329 = sbr.rel (%p327) target = $region40
        $region39: #{tpu_custom_call.1} parent=35 // pred_region
          %s330 = sand.u32 %s80, 1
          %s331 = scalar_lea.sflag [#allocation4], %s330
          %s332 = sand.u32 %s80, 1
          %s333 = smul.addr %s332, 256
          %s334 = scalar_lea.vmem [#allocation5], %s333
          %335 = dma.done %s331, 4096
        $region40: #{tpu_custom_call.1} parent=35 // pred_fallthru
          _
      $region36: #{tpu_custom_call.1} parent=5 // pred_fallthru
        _
    $region6: #{tpu_custom_call.1} parent=1 // loop_footer
      %s17 = sadd.s32 1, %s13
    $region7: #{tpu_custom_call.1} parent=1 // loop_footer_branch
      %12 = sbr.rel target = $region3
    $region8: #{tpu_custom_call.1} parent=1 // loop_exit
      _
    %336 = vsyncpa [#allocation3], 1
    %s337 = scalar_lea.sflag [#allocation3], 1
    %338 = vsyncpa %s337, 1
    %339 = vsyncpa [#allocation4], 1
    %s340 = scalar_lea.sflag [#allocation4], 1
    %341 = vsyncpa %s340, 1

</llo_original>
